<compile_context>
chip_gen: v5e
topology: v5e:2x2
jax: 0.10.0
libtpu: 0.0.40
codegen_flags: <defaults>
</compile_context>

<pallas_src>
import jax
import jax.numpy as jnp
from jax.experimental import pallas as pl
from jax.experimental.pallas import tpu as pltpu


def _stable_sigmoid(v):
    # exp argument is always <= 0, so no overflow for large |v|.
    e = jnp.exp(-jnp.abs(v))
    return jnp.where(v >= 0, 1.0 / (1.0 + e), e / (1.0 + e))


def _model_kernel(x_ref, scale_ref, y2_ref, o_ref):
    x = x_ref[...]                                   # (Bblk, N, N) f32

    # dropout(p=0.5, training): precomputed per-element scale is 0.0 (dropped) or 2.0 (kept)
    x2 = x * scale_ref[...]

    s1 = _stable_sigmoid(x)
    s2 = _stable_sigmoid(x2)

    # y1[b] = s1[b] @ s2[b].T  -- batch dim 0, contract the *last* dims of both operands,
    # so no transposed operand is materialized before the MXU.
    y1 = jax.lax.dot_general(
        s1, s2,
        dimension_numbers=(((2,), (2,)), ((0,), (0,))),
        preferred_element_type=jnp.float32,
    )

    z = y2_ref[...] + y1                             # y2 = rand_like(x)

    # softmax over dim 0 of each (N, N) problem == axis 1 of the batched block
    z_max = jnp.max(z, axis=1, keepdims=True)
    e = jnp.exp(z - z_max)
    inv = 1.0 / jnp.sum(e, axis=1, keepdims=True)    # divide only the reduced row
    o_ref[...] = e * inv                             # broadcast-multiply the full tile


def _forward_pallas(x, drop_scale, y2):
    b, n, m = x.shape
    assert n == m, "square per-problem input required for y2 + y1 to broadcast"

    # Batch-block size: largest divisor of b among (4, 2, 1). Keeps a grid of >= 2 steps
    # for b >= 8 so the "parallel" axis can be split across TensorCores (v7x megacore).
    bblk = 1
    for cand in (4, 2, 1):
        if b % cand == 0:
            bblk = cand
            break

    spec = pl.BlockSpec((bblk, n, n), lambda i: (i, 0, 0))
    return pl.pallas_call(
        _model_kernel,
        out_shape=jax.ShapeDtypeStruct((b, n, n), jnp.float32),
        grid=(b // bblk,),
        in_specs=[spec, spec, spec],
        out_specs=spec,
        compiler_params=pltpu.CompilerParams(
            dimension_semantics=("parallel",),
        ),
    )(x, drop_scale, y2)


@jax.jit
def model_forward(x, key):
    """Model.forward(x, use_sig=sigmoid) for a batch of square problems.

    x:   (B, N, N) or (N, N) float32
    key: jax PRNG key driving dropout mask + rand_like
    """
    squeeze = x.ndim == 2
    if squeeze:
        x = x[None]
    kd, kr = jax.random.split(key)
    keep = jax.random.bernoulli(kd, 0.5, x.shape)
    drop_scale = keep.astype(jnp.float32) * 2.0          # 1 / (1 - p), p = 0.5
    y2 = jax.random.uniform(kr, x.shape, dtype=jnp.float32)
    out = _forward_pallas(x, drop_scale, y2)
    return out[0] if squeeze else out


def _reference(x, drop_scale, y2):
    """Pure-JAX reference (no Pallas) for correctness checking."""
    x2 = x * drop_scale
    s1 = jax.nn.sigmoid(x)
    s2 = jax.nn.sigmoid(x2)
    y1 = jnp.einsum("bij,bkj->bik", s1, s2,
                    precision=jax.lax.Precision.HIGHEST)
    return jax.nn.softmax(y2 + y1, axis=1)


if __name__ == "__main__":
    root = jax.random.PRNGKey(0)
    kx, kfwd = jax.random.split(root)

    B, N = 8, 8
    x = jax.random.normal(kx, (B, N, N), dtype=jnp.float32)

    out = jax.block_until_ready(model_forward(x, kfwd))
    assert out.shape == (B, N, N)

    # Verify against a pure-JAX reference using the exact same (deterministic) random draws.
    kd, kr = jax.random.split(kfwd)
    drop_scale = jax.random.bernoulli(kd, 0.5, x.shape).astype(jnp.float32) * 2.0
    y2 = jax.random.uniform(kr, x.shape, dtype=jnp.float32)
    ref = _reference(x, drop_scale, y2)
    assert bool(jnp.all(jnp.abs(out - ref) < 2e-3)), "mismatch vs pure-JAX reference"

    # Columns of a dim=0 softmax must each sum to 1.
    col_sums = jnp.sum(out, axis=1)
    assert bool(jnp.all(jnp.abs(col_sums - 1.0) < 1e-4))

    # Also exercise the single-problem (N, N) path, matching the original module call shape.
    out1 = jax.block_until_ready(model_forward(x[0], kfwd))
    assert out1.shape == (N, N)

    print("KERNEL_OK")
</pallas_src>

<mosaic_0001>
module attributes {stable_mosaic.version = 11 : i64} {
  func.func @_model_kernel(%arg0: i32, %arg1: memref<4x8x8xf32, #tpu.memory_space<vmem>>, %arg2: memref<4x8x8xf32, #tpu.memory_space<vmem>>, %arg3: memref<4x8x8xf32, #tpu.memory_space<vmem>>, %arg4: memref<4x8x8xf32, #tpu.memory_space<vmem>>) attributes {dimension_semantics = [#tpu.dimension_semantics<parallel>], iteration_bounds = array<i64: 2>, scalar_prefetch = 0 : i64, scratch_operands = 0 : i64, tpu.core_type = #tpu.core_type<tc>, window_params = [{transform_indices = @transform_0, window_bounds = array<i64: 4, 8, 8>}, {transform_indices = @transform_1, window_bounds = array<i64: 4, 8, 8>}, {transform_indices = @transform_2, window_bounds = array<i64: 4, 8, 8>}, {transform_indices = @transform_3, window_bounds = array<i64: 4, 8, 8>}]} {
    %c0 = arith.constant 0 : index
    %c0_0 = arith.constant 0 : index
    %c0_1 = arith.constant 0 : index
    %0 = vector.load %arg1[%c0, %c0_0, %c0_1] : memref<4x8x8xf32, #tpu.memory_space<vmem>>, vector<4x8x8xf32>
    %c0_2 = arith.constant 0 : index
    %c0_3 = arith.constant 0 : index
    %c0_4 = arith.constant 0 : index
    %1 = vector.load %arg2[%c0_2, %c0_3, %c0_4] : memref<4x8x8xf32, #tpu.memory_space<vmem>>, vector<4x8x8xf32>
    %2 = arith.mulf %0, %1 : vector<4x8x8xf32>
    %3 = math.absf %0 : vector<4x8x8xf32>
    %cst = arith.constant 0.000000e+00 : f32
    %4 = vector.broadcast %cst : f32 to vector<4x8x8xf32>
    %5 = arith.subf %4, %3 : vector<4x8x8xf32>
    %6 = math.exp %5 : vector<4x8x8xf32>
    %cst_5 = arith.constant 0.000000e+00 : f32
    %7 = vector.broadcast %cst_5 : f32 to vector<4x8x8xf32>
    %8 = arith.cmpf oge, %0, %7 : vector<4x8x8xf32>
    %cst_6 = arith.constant 1.000000e+00 : f32
    %9 = vector.broadcast %cst_6 : f32 to vector<4x8x8xf32>
    %10 = arith.addf %9, %6 : vector<4x8x8xf32>
    %cst_7 = arith.constant 1.000000e+00 : f32
    %11 = vector.broadcast %cst_7 : f32 to vector<4x8x8xf32>
    %12 = arith.divf %11, %10 : vector<4x8x8xf32>
    %cst_8 = arith.constant 1.000000e+00 : f32
    %13 = vector.broadcast %cst_8 : f32 to vector<4x8x8xf32>
    %14 = arith.addf %13, %6 : vector<4x8x8xf32>
    %15 = arith.divf %6, %14 : vector<4x8x8xf32>
    %16 = arith.select %8, %12, %15 : vector<4x8x8xi1>, vector<4x8x8xf32>
    %17 = math.absf %2 : vector<4x8x8xf32>
    %cst_9 = arith.constant 0.000000e+00 : f32
    %18 = vector.broadcast %cst_9 : f32 to vector<4x8x8xf32>
    %19 = arith.subf %18, %17 : vector<4x8x8xf32>
    %20 = math.exp %19 : vector<4x8x8xf32>
    %cst_10 = arith.constant 0.000000e+00 : f32
    %21 = vector.broadcast %cst_10 : f32 to vector<4x8x8xf32>
    %22 = arith.cmpf oge, %2, %21 : vector<4x8x8xf32>
    %cst_11 = arith.constant 1.000000e+00 : f32
    %23 = vector.broadcast %cst_11 : f32 to vector<4x8x8xf32>
    %24 = arith.addf %23, %20 : vector<4x8x8xf32>
    %cst_12 = arith.constant 1.000000e+00 : f32
    %25 = vector.broadcast %cst_12 : f32 to vector<4x8x8xf32>
    %26 = arith.divf %25, %24 : vector<4x8x8xf32>
    %cst_13 = arith.constant 1.000000e+00 : f32
    %27 = vector.broadcast %cst_13 : f32 to vector<4x8x8xf32>
    %28 = arith.addf %27, %20 : vector<4x8x8xf32>
    %29 = arith.divf %20, %28 : vector<4x8x8xf32>
    %30 = arith.select %22, %26, %29 : vector<4x8x8xi1>, vector<4x8x8xf32>
    %cst_14 = arith.constant dense<0.000000e+00> : vector<4x8x8xf32>
    %31 = tpu.matmul %16, %30, %cst_14 {dimension_numbers = #tpu.dot_dimension_numbers<[2], [2], [1], [1], [0, 0, 0, 1, 1, 1], [0], [0]>} : vector<4x8x8xf32>, vector<4x8x8xf32>, vector<4x8x8xf32> -> vector<4x8x8xf32>
    %c0_15 = arith.constant 0 : index
    %c0_16 = arith.constant 0 : index
    %c0_17 = arith.constant 0 : index
    %32 = vector.load %arg3[%c0_15, %c0_16, %c0_17] : memref<4x8x8xf32, #tpu.memory_space<vmem>>, vector<4x8x8xf32>
    %33 = arith.addf %32, %31 : vector<4x8x8xf32>
    %cst_18 = arith.constant dense<0xFF800000> : vector<4x8xf32>
    %34 = vector.multi_reduction <maximumf>, %33, %cst_18 [1] : vector<4x8x8xf32> to vector<4x8xf32>
    %35 = vector.shape_cast %34 : vector<4x8xf32> to vector<4x1x8xf32>
    %36 = vector.broadcast %35 : vector<4x1x8xf32> to vector<4x8x8xf32>
    %37 = arith.subf %33, %36 : vector<4x8x8xf32>
    %38 = math.exp %37 : vector<4x8x8xf32>
    %cst_19 = arith.constant dense<0.000000e+00> : vector<4x8xf32>
    %39 = vector.multi_reduction <add>, %38, %cst_19 [1] : vector<4x8x8xf32> to vector<4x8xf32>
    %40 = vector.shape_cast %39 : vector<4x8xf32> to vector<4x1x8xf32>
    %cst_20 = arith.constant 1.000000e+00 : f32
    %41 = vector.broadcast %cst_20 : f32 to vector<4x1x8xf32>
    %42 = arith.divf %41, %40 : vector<4x1x8xf32>
    %43 = vector.broadcast %42 : vector<4x1x8xf32> to vector<4x8x8xf32>
    %44 = arith.mulf %38, %43 : vector<4x8x8xf32>
    %c0_21 = arith.constant 0 : index
    %c0_22 = arith.constant 0 : index
    %c0_23 = arith.constant 0 : index
    %45 = vector.load %arg4[%c0_21, %c0_22, %c0_23] : memref<4x8x8xf32, #tpu.memory_space<vmem>>, vector<4x8x8xf32>
    tpu.vector_store %arg4[%c0_21, %c0_22, %c0_23], %44 {strides = array<i32>} : memref<4x8x8xf32, #tpu.memory_space<vmem>>, vector<4x8x8xf32>,
    return
  }
  func.func @transform_0(%arg0: i32) -> (i32, i32, i32) {
    %c0_i32 = arith.constant 0 : i32
    %c0_i32_0 = arith.constant 0 : i32
    %c0_i32_1 = arith.constant 0 : i32
    return %arg0, %c0_i32, %c0_i32_0 : i32, i32, i32
  }
  func.func @transform_1(%arg0: i32) -> (i32, i32, i32) {
    %c0_i32 = arith.constant 0 : i32
    %c0_i32_0 = arith.constant 0 : i32
    %c0_i32_1 = arith.constant 0 : i32
    return %arg0, %c0_i32, %c0_i32_0 : i32, i32, i32
  }
  func.func @transform_2(%arg0: i32) -> (i32, i32, i32) {
    %c0_i32 = arith.constant 0 : i32
    %c0_i32_0 = arith.constant 0 : i32
    %c0_i32_1 = arith.constant 0 : i32
    return %arg0, %c0_i32, %c0_i32_0 : i32, i32, i32
  }
  func.func @transform_3(%arg0: i32) -> (i32, i32, i32) {
    %c0_i32 = arith.constant 0 : i32
    %c0_i32_0 = arith.constant 0 : i32
    %c0_i32_1 = arith.constant 0 : i32
    return %arg0, %c0_i32, %c0_i32_0 : i32, i32, i32
  }
}

</mosaic_0001>

<llo_original>
// kernel: model_forward.3
$region0: #{model_forward.3}
  #allocation0 [shape = 'u32[]', space=smem, size = 0x4, offset = 0x4, fixed_abs, tag = 'smem constant byte address 0x4 - core index']
  #allocation1 [shape = 'u32[72,128]{1,0:T(1,128)}', space=vmem, size = 0x9000, scoped, tag = 'internal scratch']
  %s0 = inlined_call_operand.vmem [shape: f32[8,8,8], index: 0, kind: input, shape index: {}]
  %s1 = inlined_call_operand.vmem [shape: f32[8,8,8], index: 1, kind: input, shape index: {}]
  %s2 = inlined_call_operand.vmem [shape: f32[8,8,8], index: 2, kind: input, shape index: {}]
  %s3 = inlined_call_operand.hbm [shape: f32[8,8,8], index: 3, kind: output, shape index: {}]
  %s4 = sld [smem:[#allocation0]]
  $region45: #{model_forward.3} parent=0
    _
  %s6 = ssub.s32 1, %s4
  %s7 = scalar_select 0, %s6, %s4
  $region1: #{model_forward.3} parent=0
    #allocation2 [shape = 'u8[32768]{0}', space=vmem, size = 0x8000, scoped, tag = 'output window, operand 0']
    #allocation3 [shape = 's32[2]{0}', space=sflag, size = 0x8, scoped, tag = 'scoped memory for model_forward.3']
    %8 = vsyncpa [#allocation3], 0
    %s9 = scalar_lea.sflag [#allocation3], 1
    %10 = vsyncpa %s9, 0
    loop: start=0, step=1, limit=4
    $region2: #{model_forward.3} parent=1 // loop_pre_header
      _
    $region3: #{model_forward.3} parent=1 // loop_header
      %s12 = sphi 0, %s16
      %p13 = scmp.ge.s32.totalorder %s12, 4
      %s22 = sphi 0, %s24
      %s25 = sphi 0, %s22
      %s26 = sphi 0, %s25
      %s42 = sphi 0, %s26
      %s48 = sphi 0, %s50
      %s51 = sphi 0, %s48
      %s52 = sphi 0, %s51
      %s68 = sphi 0, %s52
      %s74 = sphi 0, %s76
      %s77 = sphi 0, %s74
      %s78 = sphi 0, %s77
      %s94 = sphi 0, %s78
      %s100 = sphi 0, %s102
      %s103 = sphi 0, %s100
      %s104 = sphi 0, %s103
      %s120 = sphi 0, %s104
    $region4: #{model_forward.3} parent=1 // loop_header_branch
      %15 = sbr.rel (%p13) target = $region8
    $region5: #{model_forward.3} parent=1 // loop_body
      %s17 = ssub.s32 %s12, 1
      %s18 = ssub.s32 %s12, 2
      %s19 = sadd.s32 %s12, 1
      %s20 = ssub.s32 %s12, %s19
      %p21 = scmp.eq.s32.totalorder %s20, 0
      %s23 = sadd.s32 %s22, 1
      %s24 = scalar_select %p21, %s22, %s23
      %p27 = pneg %p21
      %p28 = scmp.eq.s32.totalorder %s12, 1
      %p29 = por %p27, %p28
      %p30 = scmp.ne.s32.totalorder %s22, %s25
      %p31 = scmp.eq.s32.totalorder %s12, 0
      %p32 = por %p30, %p31
      %p33 = scmp.ne.s32.totalorder %s22, %s25
      %p34 = scmp.eq.s32.totalorder %s17, 1
      %p35 = por %p33, %p34
      %p36 = scmp.ne.s32.totalorder %s25, %s26
      %p37 = scmp.eq.s32.totalorder %s17, 0
      %p38 = por %p36, %p37
      %p39 = scmp.ne.s32.totalorder %s25, %s26
      %p40 = scmp.eq.s32.totalorder %s18, 1
      %p41 = por %p39, %p40
      %p43 = scmp.ne.s32.totalorder %s26, %s42
      %p44 = scmp.eq.s32.totalorder %s18, 0
      %p45 = por %p43, %p44
      %s46 = ssub.s32 %s12, %s19
      %p47 = scmp.eq.s32.totalorder %s46, 0
      %s49 = sadd.s32 %s48, 1
      %s50 = scalar_select %p47, %s48, %s49
      %p53 = pneg %p47
      %p54 = scmp.eq.s32.totalorder %s12, 1
      %p55 = por %p53, %p54
      %p56 = scmp.ne.s32.totalorder %s48, %s51
      %p57 = scmp.eq.s32.totalorder %s12, 0
      %p58 = por %p56, %p57
      %p59 = scmp.ne.s32.totalorder %s48, %s51
      %p60 = scmp.eq.s32.totalorder %s17, 1
      %p61 = por %p59, %p60
      %p62 = scmp.ne.s32.totalorder %s51, %s52
      %p63 = scmp.eq.s32.totalorder %s17, 0
      %p64 = por %p62, %p63
      %p65 = scmp.ne.s32.totalorder %s51, %s52
      %p66 = scmp.eq.s32.totalorder %s18, 1
      %p67 = por %p65, %p66
      %p69 = scmp.ne.s32.totalorder %s52, %s68
      %p70 = scmp.eq.s32.totalorder %s18, 0
      %p71 = por %p69, %p70
      %s72 = ssub.s32 %s12, %s19
      %p73 = scmp.eq.s32.totalorder %s72, 0
      %s75 = sadd.s32 %s74, 1
      %s76 = scalar_select %p73, %s74, %s75
      %p79 = pneg %p73
      %p80 = scmp.eq.s32.totalorder %s12, 1
      %p81 = por %p79, %p80
      %p82 = scmp.ne.s32.totalorder %s74, %s77
      %p83 = scmp.eq.s32.totalorder %s12, 0
      %p84 = por %p82, %p83
      %p85 = scmp.ne.s32.totalorder %s74, %s77
      %p86 = scmp.eq.s32.totalorder %s17, 1
      %p87 = por %p85, %p86
      %p88 = scmp.ne.s32.totalorder %s77, %s78
      %p89 = scmp.eq.s32.totalorder %s17, 0
      %p90 = por %p88, %p89
      %p91 = scmp.ne.s32.totalorder %s77, %s78
      %p92 = scmp.eq.s32.totalorder %s18, 1
      %p93 = por %p91, %p92
      %p95 = scmp.ne.s32.totalorder %s78, %s94
      %p96 = scmp.eq.s32.totalorder %s18, 0
      %p97 = por %p95, %p96
      %s98 = ssub.s32 %s12, %s19
      %p99 = scmp.eq.s32.totalorder %s98, 0
      %s101 = sadd.s32 %s100, 1
      %s102 = scalar_select %p99, %s100, %s101
      %p105 = pneg %p99
      %p106 = scmp.eq.s32.totalorder %s12, 1
      %p107 = por %p105, %p106
      %p108 = scmp.ne.s32.totalorder %s100, %s103
      %p109 = scmp.eq.s32.totalorder %s12, 0
      %p110 = por %p108, %p109
      %p111 = scmp.ne.s32.totalorder %s100, %s103
      %p112 = scmp.eq.s32.totalorder %s17, 1
      %p113 = por %p111, %p112
      %p114 = scmp.ne.s32.totalorder %s103, %s104
      %p115 = scmp.eq.s32.totalorder %s17, 0
      %p116 = por %p114, %p115
      %p117 = scmp.ne.s32.totalorder %s103, %s104
      %p118 = scmp.eq.s32.totalorder %s18, 1
      %p119 = por %p117, %p118
      %p121 = scmp.ne.s32.totalorder %s104, %s120
      %p122 = scmp.eq.s32.totalorder %s18, 0
      %p123 = por %p121, %p122
      %p124 = scmp.le.s32.totalorder 1, %s12
      %p125 = scmp.lt.s32.totalorder %s12, 3
      %p126 = pnand %p124, %p125
      %p127 = pneg %p126
      // Predicated region
      $region9: #{model_forward.3} parent=5 // pred_check
        _
      $region10: #{model_forward.3} parent=5 // pred_check_branch
        %129 = sbr.rel (%p126) target = $region12
      $region11: #{model_forward.3} parent=5 // pred_region
        %s130 = ssub.s32 %s12, 1
      $region12: #{model_forward.3} parent=5 // pred_fallthru
        _
      %p131 = scmp.lt.s32.totalorder %s12, 2
      // Predicated region
      $region13: #{model_forward.3} parent=5 // pred_check
        %p132 = pneg %p131
      $region14: #{model_forward.3} parent=5 // pred_check_branch
        %134 = sbr.rel (%p132) target = $region16
      $region15: #{model_forward.3} parent=5 // pred_region
        // Predicated region
        $region17: #{model_forward.3} parent=15 // pred_check
          %p135 = pneg %p32
        $region18: #{model_forward.3} parent=15 // pred_check_branch
          %137 = sbr.rel (%p135) target = $region20
        $region19: #{model_forward.3} parent=15 // pred_region
          %s138 = smul.u32 4, %s12
          %p139 = scmp.lt.s32.totalorder %s138, 7
          %s140 = scalar_select %p139, %s138, 7
          %s141 = smul.addr %s140, 8
          %s142 = scalar_lea.vmem %s0, %s141
          %s143 = smul.u32 4, %s12
        $region20: #{model_forward.3} parent=15 // pred_fallthru
          _
        // Predicated region
        $region21: #{model_forward.3} parent=15 // pred_check
          %p144 = pneg %p58
        $region22: #{model_forward.3} parent=15 // pred_check_branch
          %146 = sbr.rel (%p144) target = $region24
        $region23: #{model_forward.3} parent=15 // pred_region
          %s147 = smul.u32 4, %s12
          %p148 = scmp.lt.s32.totalorder %s147, 7
          %s149 = scalar_select %p148, %s147, 7
          %s150 = smul.addr %s149, 8
          %s151 = scalar_lea.vmem %s1, %s150
          %s152 = smul.u32 4, %s12
        $region24: #{model_forward.3} parent=15 // pred_fallthru
          _
        // Predicated region
        $region25: #{model_forward.3} parent=15 // pred_check
          %p153 = pneg %p84
        $region26: #{model_forward.3} parent=15 // pred_check_branch
          %155 = sbr.rel (%p153) target = $region28
        $region27: #{model_forward.3} parent=15 // pred_region
          %s156 = smul.u32 4, %s12
          %p157 = scmp.lt.s32.totalorder %s156, 7
          %s158 = scalar_select %p157, %s156, 7
          %s159 = smul.addr %s158, 8
          %s160 = scalar_lea.vmem %s2, %s159
          %s161 = smul.u32 4, %s12
        $region28: #{model_forward.3} parent=15 // pred_fallthru
          _
      $region16: #{model_forward.3} parent=5 // pred_fallthru
        _
      %p162 = scmp.le.s32.totalorder 1, %s12
      %p163 = scmp.lt.s32.totalorder %s12, 3
      %p164 = pnand %p162, %p163
      %p165 = pneg %p164
      // Predicated region
      $region29: #{model_forward.3} parent=5 // pred_check
        _
      $region30: #{model_forward.3} parent=5 // pred_check_branch
        %167 = sbr.rel (%p164) target = $region32
      $region31: #{model_forward.3} parent=5 // pred_region
        %s168 = ssub.s32 %s12, 1
        %s169 = smul.u32 4, %s17
        %p170 = scmp.lt.s32.totalorder %s169, 7
        %s171 = scalar_select %p170, %s169, 7
        %s172 = smul.addr %s171, 8
        %s173 = scalar_lea.vmem %s0, %s172
        %p174 = pneg %p38
        %p175 = pneg %p35
        %s176 = smul.u32 4, %s17
        %p177 = scmp.lt.s32.totalorder %s176, 7
        %s178 = scalar_select %p177, %s176, 7
        %s179 = smul.addr %s178, 8
        %s180 = scalar_lea.vmem %s1, %s179
        %p181 = pneg %p64
        %p182 = pneg %p61
        %s183 = smul.u32 4, %s17
        %p184 = scmp.lt.s32.totalorder %s183, 7
        %s185 = scalar_select %p184, %s183, 7
        %s186 = smul.addr %s185, 8
        %s187 = scalar_lea.vmem %s2, %s186
        %p188 = pneg %p90
        %p189 = pneg %p87
        %p190 = pneg %p116
        %p191 = pneg %p113
        %s192 = sand.u32 %s103, 1
        %s193 = scalar_lea.sflag [#allocation3], %s192
        %s194 = sand.u32 %s103, 1
        %s195 = smul.addr %s194, 32
        %s196 = scalar_lea.vmem [#allocation2], %s195
        %s197 = smul.u32 4, %s17
        %p198 = scmp.lt.s32.totalorder %s197, 7
        %s199 = scalar_select %p198, %s197, 7
        %s200 = smul.addr %s199, 8
        %s201 = scalar_lea.vmem %s0, %s200
        %s202 = smul.u32 4, %s17
        %s203 = smul.u32 4, %s17
        %p204 = scmp.lt.s32.totalorder %s203, 7
        %s205 = scalar_select %p204, %s203, 7
        %s206 = smul.addr %s205, 8
        %s207 = scalar_lea.vmem %s1, %s206
        %s208 = smul.u32 4, %s17
        %s209 = smul.u32 4, %s17
        %p210 = scmp.lt.s32.totalorder %s209, 7
        %s211 = scalar_select %p210, %s209, 7
        %s212 = smul.addr %s211, 8
        %s213 = scalar_lea.vmem %s2, %s212
        %s214 = smul.u32 4, %s17
        %s215 = smul.u32 4, %s17
        %v216 = vld [vmem:[%s201] sm:$0xff]
        %v217 = vld [vmem:[%s201 + $0x8] sm:$0xff]
        %v218 = vld [vmem:[%s201 + $0x10] sm:$0xff]
        %v219 = vld [vmem:[%s201 + $0x18] sm:$0xff]
        %v220 = vld [vmem:[%s207] sm:$0xff]
        %v221 = vld [vmem:[%s207 + $0x8] sm:$0xff]
        %v222 = vld [vmem:[%s207 + $0x10] sm:$0xff]
        %v223 = vld [vmem:[%s207 + $0x18] sm:$0xff]
        %v224 = vmul.f32 %v216, %v220
        %v225 = vmul.f32 %v217, %v221
        %v226 = vmul.f32 %v218, %v222
        %v227 = vmul.f32 %v219, %v223
        %v228 = vand.u32 2147483647, %v216
        %v229 = vand.u32 2147483647, %v217
        %v230 = vand.u32 2147483647, %v218
        %v231 = vand.u32 2147483647, %v219
        %v232 = vsub.f32 0.0, %v228
        %v233 = vsub.f32 0.0, %v229
        %v234 = vsub.f32 0.0, %v230
        %v235 = vsub.f32 0.0, %v231
        %v236 = vmul.f32 %v232, 1.442695
        %v237 = vpow.pop %v236
        %v238 = vmul.f32 %v233, 1.442695
        %v239 = vpow.pop %v238
        %v240 = vmul.f32 %v234, 1.442695
        %v241 = vpow.pop %v240
        %v242 = vmul.f32 %v235, 1.442695
        %v243 = vpow.pop %v242
        %vm244 = vcmp.ge.f32.partialorder %v216, 0.0
        %vm245 = vcmp.ge.f32.partialorder %v217, 0.0
        %vm246 = vcmp.ge.f32.partialorder %v218, 0.0
        %vm247 = vcmp.ge.f32.partialorder %v219, 0.0
        %v248 = vadd.f32 %v237, 1.0
        %v249 = vadd.f32 %v239, 1.0
        %v250 = vadd.f32 %v241, 1.0
        %v251 = vadd.f32 %v243, 1.0
        %v252 = vrcp.pop %v248
        %v253 = vmul.f32 %v248, %v252
        %v254 = vsub.f32 1.0, %v253
        %v255 = vmul.f32 %v252, %v254
        %v256 = vadd.f32 %v252, %v255
        %vm257 = vweird.f32 %v248
        %vm258 = vweird.f32 %v252
        %vm259 = vmor %vm257, %vm258
        %v260 = vsel %vm259, %v252, %v256
        %v261 = vand.u32 2147483647, %v248
        %vm262 = vcmp.eq.f32.partialorder %v261, 8.507059e+37
        %v263 = vand.u32 %v248, 2147483648
        %v264 = vor.u32 1.1754944e-38, %v263
        %v265 = vsel %vm262, %v264, %v260
        %v266 = vmul.f32 1.0, %v265
        %v267 = vrcp.pop %v249
        %v268 = vmul.f32 %v249, %v267
        %v269 = vsub.f32 1.0, %v268
        %v270 = vmul.f32 %v267, %v269
        %v271 = vadd.f32 %v267, %v270
        %vm272 = vweird.f32 %v249
        %vm273 = vweird.f32 %v267
        %vm274 = vmor %vm272, %vm273
        %v275 = vsel %vm274, %v267, %v271
        %v276 = vand.u32 2147483647, %v249
        %vm277 = vcmp.eq.f32.partialorder %v276, 8.507059e+37
        %v278 = vand.u32 %v249, 2147483648
        %v279 = vor.u32 1.1754944e-38, %v278
        %v280 = vsel %vm277, %v279, %v275
        %v281 = vmul.f32 1.0, %v280
        %v282 = vrcp.pop %v250
        %v283 = vmul.f32 %v250, %v282
        %v284 = vsub.f32 1.0, %v283
        %v285 = vmul.f32 %v282, %v284
        %v286 = vadd.f32 %v282, %v285
        %vm287 = vweird.f32 %v250
        %vm288 = vweird.f32 %v282
        %vm289 = vmor %vm287, %vm288
        %v290 = vsel %vm289, %v282, %v286
        %v291 = vand.u32 2147483647, %v250
        %vm292 = vcmp.eq.f32.partialorder %v291, 8.507059e+37
        %v293 = vand.u32 %v250, 2147483648
        %v294 = vor.u32 1.1754944e-38, %v293
        %v295 = vsel %vm292, %v294, %v290
        %v296 = vmul.f32 1.0, %v295
        %v297 = vrcp.pop %v251
        %v298 = vmul.f32 %v251, %v297
        %v299 = vsub.f32 1.0, %v298
        %v300 = vmul.f32 %v297, %v299
        %v301 = vadd.f32 %v297, %v300
        %vm302 = vweird.f32 %v251
        %vm303 = vweird.f32 %v297
        %vm304 = vmor %vm302, %vm303
        %v305 = vsel %vm304, %v297, %v301
        %v306 = vand.u32 2147483647, %v251
        %vm307 = vcmp.eq.f32.partialorder %v306, 8.507059e+37
        %v308 = vand.u32 %v251, 2147483648
        %v309 = vor.u32 1.1754944e-38, %v308
        %v310 = vsel %vm307, %v309, %v305
        %v311 = vmul.f32 1.0, %v310
        %v312 = vmul.f32 %v237, %v265
        %v313 = vmul.f32 %v239, %v280
        %v314 = vmul.f32 %v241, %v295
        %v315 = vmul.f32 %v243, %v310
        %v316 = vsel %vm244, %v266, %v312
        %v317 = vsel %vm245, %v281, %v313
        %v318 = vsel %vm246, %v296, %v314
        %v319 = vsel %vm247, %v311, %v315
        %v320 = vand.u32 2147483647, %v224
        %v321 = vand.u32 2147483647, %v225
        %v322 = vand.u32 2147483647, %v226
        %v323 = vand.u32 2147483647, %v227
        %v324 = vsub.f32 0.0, %v320
        %v325 = vsub.f32 0.0, %v321
        %v326 = vsub.f32 0.0, %v322
        %v327 = vsub.f32 0.0, %v323
        %v328 = vmul.f32 %v324, 1.442695
        %v329 = vpow.pop %v328
        %v330 = vmul.f32 %v325, 1.442695
        %v331 = vpow.pop %v330
        %v332 = vmul.f32 %v326, 1.442695
        %v333 = vpow.pop %v332
        %v334 = vmul.f32 %v327, 1.442695
        %v335 = vpow.pop %v334
        %vm336 = vcmp.ge.f32.partialorder %v224, 0.0
        %vm337 = vcmp.ge.f32.partialorder %v225, 0.0
        %vm338 = vcmp.ge.f32.partialorder %v226, 0.0
        %vm339 = vcmp.ge.f32.partialorder %v227, 0.0
        %v340 = vadd.f32 %v329, 1.0
        %v341 = vadd.f32 %v331, 1.0
        %v342 = vadd.f32 %v333, 1.0
        %v343 = vadd.f32 %v335, 1.0
        %v344 = vrcp.pop %v340
        %v345 = vmul.f32 %v340, %v344
        %v346 = vsub.f32 1.0, %v345
        %v347 = vmul.f32 %v344, %v346
        %v348 = vadd.f32 %v344, %v347
        %vm349 = vweird.f32 %v340
        %vm350 = vweird.f32 %v344
        %vm351 = vmor %vm349, %vm350
        %v352 = vsel %vm351, %v344, %v348
        %v353 = vand.u32 2147483647, %v340
        %vm354 = vcmp.eq.f32.partialorder %v353, 8.507059e+37
        %v355 = vand.u32 %v340, 2147483648
        %v356 = vor.u32 1.1754944e-38, %v355
        %v357 = vsel %vm354, %v356, %v352
        %v358 = vmul.f32 1.0, %v357
        %v359 = vrcp.pop %v341
        %v360 = vmul.f32 %v341, %v359
        %v361 = vsub.f32 1.0, %v360
        %v362 = vmul.f32 %v359, %v361
        %v363 = vadd.f32 %v359, %v362
        %vm364 = vweird.f32 %v341
        %vm365 = vweird.f32 %v359
        %vm366 = vmor %vm364, %vm365
        %v367 = vsel %vm366, %v359, %v363
        %v368 = vand.u32 2147483647, %v341
        %vm369 = vcmp.eq.f32.partialorder %v368, 8.507059e+37
        %v370 = vand.u32 %v341, 2147483648
        %v371 = vor.u32 1.1754944e-38, %v370
        %v372 = vsel %vm369, %v371, %v367
        %v373 = vmul.f32 1.0, %v372
        %v374 = vrcp.pop %v342
        %v375 = vmul.f32 %v342, %v374
        %v376 = vsub.f32 1.0, %v375
        %v377 = vmul.f32 %v374, %v376
        %v378 = vadd.f32 %v374, %v377
        %vm379 = vweird.f32 %v342
        %vm380 = vweird.f32 %v374
        %vm381 = vmor %vm379, %vm380
        %v382 = vsel %vm381, %v374, %v378
        %v383 = vand.u32 2147483647, %v342
        %vm384 = vcmp.eq.f32.partialorder %v383, 8.507059e+37
        %v385 = vand.u32 %v342, 2147483648
        %v386 = vor.u32 1.1754944e-38, %v385
        %v387 = vsel %vm384, %v386, %v382
        %v388 = vmul.f32 1.0, %v387
        %v389 = vrcp.pop %v343
        %v390 = vmul.f32 %v343, %v389
        %v391 = vsub.f32 1.0, %v390
        %v392 = vmul.f32 %v389, %v391
        %v393 = vadd.f32 %v389, %v392
        %vm394 = vweird.f32 %v343
        %vm395 = vweird.f32 %v389
        %vm396 = vmor %vm394, %vm395
        %v397 = vsel %vm396, %v389, %v393
        %v398 = vand.u32 2147483647, %v343
        %vm399 = vcmp.eq.f32.partialorder %v398, 8.507059e+37
        %v400 = vand.u32 %v343, 2147483648
        %v401 = vor.u32 1.1754944e-38, %v400
        %v402 = vsel %vm399, %v401, %v397
        %v403 = vmul.f32 1.0, %v402
        %v404 = vmul.f32 %v329, %v357
        %v405 = vmul.f32 %v331, %v372
        %v406 = vmul.f32 %v333, %v387
        %v407 = vmul.f32 %v335, %v402
        %v408 = vsel %vm336, %v358, %v404
        %v409 = vsel %vm337, %v373, %v405
        %v410 = vsel %vm338, %v388, %v406
        %v411 = vsel %vm339, %v403, %v407
        %vm412 = vcmask 64512
        %v414 = vsel %vm412, %v316, 0
        %v417 = vsel %vm412, %v408, 0
        %419 = vmatpush.xpose.msra.mxu0 0.0
        %420 = vmatpush.xpose.msra.mxu0 0.0
        %421 = vmatpush.xpose.msra.mxu0 0.0
        %422 = vmatpush.xpose.msra.mxu0 0.0
        %423 = vmatpush.xpose.msra.mxu0 0.0
        %424 = vmatpush.xpose.msra.mxu0 0.0
        %425 = vmatpush.xpose.msra.mxu0 0.0
        %426 = vmatpush.xpose.msra.mxu0 0.0
        %427 = vmatpush.xpose.msra.mxu0 0.0
        %428 = vmatpush.xpose.msra.mxu0 0.0
        %429 = vmatpush.xpose.msra.mxu0 0.0
        %430 = vmatpush.xpose.msra.mxu0 0.0
        %431 = vmatpush.xpose.msra.mxu0 0.0
        %432 = vmatpush.xpose.msra.mxu0 0.0
        %433 = vmatpush.xpose.msra.mxu0 0.0
        %434 = vmatpush.xpose.msra.mxu0 %v417
        %435 = vmatmul.f32.gmra.mxu0 %v414
        %v436 = vpop.f32.mrf.mxu0
        %v437 = vadd.f32 0.0, %v436
        %438 = vdwg.mxu0
        %v440 = vsel %vm412, %v317, 0
        %v443 = vsel %vm412, %v409, 0
        %445 = vmatpush.xpose.msra.mxu0 0.0
        %446 = vmatpush.xpose.msra.mxu0 0.0
        %447 = vmatpush.xpose.msra.mxu0 0.0
        %448 = vmatpush.xpose.msra.mxu0 0.0
        %449 = vmatpush.xpose.msra.mxu0 0.0
        %450 = vmatpush.xpose.msra.mxu0 0.0
        %451 = vmatpush.xpose.msra.mxu0 0.0
        %452 = vmatpush.xpose.msra.mxu0 0.0
        %453 = vmatpush.xpose.msra.mxu0 0.0
        %454 = vmatpush.xpose.msra.mxu0 0.0
        %455 = vmatpush.xpose.msra.mxu0 0.0
        %456 = vmatpush.xpose.msra.mxu0 0.0
        %457 = vmatpush.xpose.msra.mxu0 0.0
        %458 = vmatpush.xpose.msra.mxu0 0.0
        %459 = vmatpush.xpose.msra.mxu0 0.0
        %460 = vmatpush.xpose.msra.mxu0 %v443
        %461 = vmatmul.f32.gmra.mxu0 %v440
        %v462 = vpop.f32.mrf.mxu0
        %v463 = vadd.f32 0.0, %v462
        %464 = vdwg.mxu0
        %v466 = vsel %vm412, %v318, 0
        %v469 = vsel %vm412, %v410, 0
        %471 = vmatpush.xpose.msra.mxu0 0.0
        %472 = vmatpush.xpose.msra.mxu0 0.0
        %473 = vmatpush.xpose.msra.mxu0 0.0
        %474 = vmatpush.xpose.msra.mxu0 0.0
        %475 = vmatpush.xpose.msra.mxu0 0.0
        %476 = vmatpush.xpose.msra.mxu0 0.0
        %477 = vmatpush.xpose.msra.mxu0 0.0
        %478 = vmatpush.xpose.msra.mxu0 0.0
        %479 = vmatpush.xpose.msra.mxu0 0.0
        %480 = vmatpush.xpose.msra.mxu0 0.0
        %481 = vmatpush.xpose.msra.mxu0 0.0
        %482 = vmatpush.xpose.msra.mxu0 0.0
        %483 = vmatpush.xpose.msra.mxu0 0.0
        %484 = vmatpush.xpose.msra.mxu0 0.0
        %485 = vmatpush.xpose.msra.mxu0 0.0
        %486 = vmatpush.xpose.msra.mxu0 %v469
        %487 = vmatmul.f32.gmra.mxu0 %v466
        %v488 = vpop.f32.mrf.mxu0
        %v489 = vadd.f32 0.0, %v488
        %490 = vdwg.mxu0
        %v492 = vsel %vm412, %v319, 0
        %v495 = vsel %vm412, %v411, 0
        %497 = vmatpush.xpose.msra.mxu0 0.0
        %498 = vmatpush.xpose.msra.mxu0 0.0
        %499 = vmatpush.xpose.msra.mxu0 0.0
        %500 = vmatpush.xpose.msra.mxu0 0.0
        %501 = vmatpush.xpose.msra.mxu0 0.0
        %502 = vmatpush.xpose.msra.mxu0 0.0
        %503 = vmatpush.xpose.msra.mxu0 0.0
        %504 = vmatpush.xpose.msra.mxu0 0.0
        %505 = vmatpush.xpose.msra.mxu0 0.0
        %506 = vmatpush.xpose.msra.mxu0 0.0
        %507 = vmatpush.xpose.msra.mxu0 0.0
        %508 = vmatpush.xpose.msra.mxu0 0.0
        %509 = vmatpush.xpose.msra.mxu0 0.0
        %510 = vmatpush.xpose.msra.mxu0 0.0
        %511 = vmatpush.xpose.msra.mxu0 0.0
        %512 = vmatpush.xpose.msra.mxu0 %v495
        %513 = vmatmul.f32.gmra.mxu0 %v492
        %v514 = vpop.f32.mrf.mxu0
        %v515 = vadd.f32 0.0, %v514
        %516 = vdwg.mxu0
        %v517 = vld [vmem:[%s213] sm:$0xff]
        %v518 = vld [vmem:[%s213 + $0x8] sm:$0xff]
        %v519 = vld [vmem:[%s213 + $0x10] sm:$0xff]
        %v520 = vld [vmem:[%s213 + $0x18] sm:$0xff]
        %v521 = vadd.f32 %v517, %v437
        %v522 = vadd.f32 %v518, %v463
        %v523 = vadd.f32 %v519, %v489
        %v524 = vadd.f32 %v520, %v515
        %v525 = vsel %vm412, %v521, -inf
        %v526 = vrot.slane %v525, 4
        %v527 = vmax.f32 %v525, %v526
        %v528 = vrot.slane %v527, 2
        %v529 = vmax.f32 %v527, %v528
        %v530 = vrot.slane %v529, 1
        %v531 = vmax.f32 %v529, %v530
        %v532 = vsel %vm412, %v522, -inf
        %v533 = vrot.slane %v532, 4
        %v534 = vmax.f32 %v532, %v533
        %v535 = vrot.slane %v534, 2
        %v536 = vmax.f32 %v534, %v535
        %v537 = vrot.slane %v536, 1
        %v538 = vmax.f32 %v536, %v537
        %v539 = vsel %vm412, %v523, -inf
        %v540 = vrot.slane %v539, 4
        %v541 = vmax.f32 %v539, %v540
        %v542 = vrot.slane %v541, 2
        %v543 = vmax.f32 %v541, %v542
        %v544 = vrot.slane %v543, 1
        %v545 = vmax.f32 %v543, %v544
        %v546 = vsel %vm412, %v524, -inf
        %v547 = vrot.slane %v546, 4
        %v548 = vmax.f32 %v546, %v547
        %v549 = vrot.slane %v548, 2
        %v550 = vmax.f32 %v548, %v549
        %v551 = vrot.slane %v550, 1
        %v552 = vmax.f32 %v550, %v551
        %v553 = vsub.f32 %v521, %v531
        %v554 = vsub.f32 %v522, %v538
        %v555 = vsub.f32 %v523, %v545
        %v556 = vsub.f32 %v524, %v552
        %v557 = vmul.f32 %v553, 1.442695
        %v558 = vpow.pop %v557
        %v559 = vmul.f32 %v554, 1.442695
        %v560 = vpow.pop %v559
        %v561 = vmul.f32 %v555, 1.442695
        %v562 = vpow.pop %v561
        %v563 = vmul.f32 %v556, 1.442695
        %v564 = vpow.pop %v563
        %v565 = vsel %vm412, %v558, 0.0
        %v566 = vrot.slane %v565, 4
        %v567 = vadd.f32 %v565, %v566
        %v568 = vrot.slane %v567, 2
        %v569 = vadd.f32 %v567, %v568
        %v570 = vrot.slane %v569, 1
        %v571 = vadd.f32 %v569, %v570
        %v572 = vsel %vm412, %v560, 0.0
        %v573 = vrot.slane %v572, 4
        %v574 = vadd.f32 %v572, %v573
        %v575 = vrot.slane %v574, 2
        %v576 = vadd.f32 %v574, %v575
        %v577 = vrot.slane %v576, 1
        %v578 = vadd.f32 %v576, %v577
        %v579 = vsel %vm412, %v562, 0.0
        %v580 = vrot.slane %v579, 4
        %v581 = vadd.f32 %v579, %v580
        %v582 = vrot.slane %v581, 2
        %v583 = vadd.f32 %v581, %v582
        %v584 = vrot.slane %v583, 1
        %v585 = vadd.f32 %v583, %v584
        %v586 = vsel %vm412, %v564, 0.0
        %v587 = vrot.slane %v586, 4
        %v588 = vadd.f32 %v586, %v587
        %v589 = vrot.slane %v588, 2
        %v590 = vadd.f32 %v588, %v589
        %v591 = vrot.slane %v590, 1
        %v592 = vadd.f32 %v590, %v591
        %v593 = vrcp.pop %v571
        %v594 = vmul.f32 %v571, %v593
        %v595 = vsub.f32 1.0, %v594
        %v596 = vmul.f32 %v593, %v595
        %v597 = vadd.f32 %v593, %v596
        %vm598 = vweird.f32 %v571
        %vm599 = vweird.f32 %v593
        %vm600 = vmor %vm598, %vm599
        %v601 = vsel %vm600, %v593, %v597
        %v602 = vand.u32 2147483647, %v571
        %vm603 = vcmp.eq.f32.partialorder %v602, 8.507059e+37
        %v604 = vand.u32 %v571, 2147483648
        %v605 = vor.u32 1.1754944e-38, %v604
        %v606 = vsel %vm603, %v605, %v601
        %v607 = vmul.f32 1.0, %v606
        %v608 = vrcp.pop %v578
        %v609 = vmul.f32 %v578, %v608
        %v610 = vsub.f32 1.0, %v609
        %v611 = vmul.f32 %v608, %v610
        %v612 = vadd.f32 %v608, %v611
        %vm613 = vweird.f32 %v578
        %vm614 = vweird.f32 %v608
        %vm615 = vmor %vm613, %vm614
        %v616 = vsel %vm615, %v608, %v612
        %v617 = vand.u32 2147483647, %v578
        %vm618 = vcmp.eq.f32.partialorder %v617, 8.507059e+37
        %v619 = vand.u32 %v578, 2147483648
        %v620 = vor.u32 1.1754944e-38, %v619
        %v621 = vsel %vm618, %v620, %v616
        %v622 = vmul.f32 1.0, %v621
        %v623 = vrcp.pop %v585
        %v624 = vmul.f32 %v585, %v623
        %v625 = vsub.f32 1.0, %v624
        %v626 = vmul.f32 %v623, %v625
        %v627 = vadd.f32 %v623, %v626
        %vm628 = vweird.f32 %v585
        %vm629 = vweird.f32 %v623
        %vm630 = vmor %vm628, %vm629
        %v631 = vsel %vm630, %v623, %v627
        %v632 = vand.u32 2147483647, %v585
        %vm633 = vcmp.eq.f32.partialorder %v632, 8.507059e+37
        %v634 = vand.u32 %v585, 2147483648
        %v635 = vor.u32 1.1754944e-38, %v634
        %v636 = vsel %vm633, %v635, %v631
        %v637 = vmul.f32 1.0, %v636
        %v638 = vrcp.pop %v592
        %v639 = vmul.f32 %v592, %v638
        %v640 = vsub.f32 1.0, %v639
        %v641 = vmul.f32 %v638, %v640
        %v642 = vadd.f32 %v638, %v641
        %vm643 = vweird.f32 %v592
        %vm644 = vweird.f32 %v638
        %vm645 = vmor %vm643, %vm644
        %v646 = vsel %vm645, %v638, %v642
        %v647 = vand.u32 2147483647, %v592
        %vm648 = vcmp.eq.f32.partialorder %v647, 8.507059e+37
        %v649 = vand.u32 %v592, 2147483648
        %v650 = vor.u32 1.1754944e-38, %v649
        %v651 = vsel %vm648, %v650, %v646
        %v652 = vmul.f32 1.0, %v651
        %v653 = vmul.f32 %v558, %v607
        %v654 = vmul.f32 %v560, %v622
        %v655 = vmul.f32 %v562, %v637
        %v656 = vmul.f32 %v564, %v652
        %657 = vst.msk [vmem:[%s196] sm:$0xff] %vm412, %v653
        %658 = vst.msk [vmem:[%s196 + $0x8] sm:$0xff] %vm412, %v654
        %659 = vst.msk [vmem:[%s196 + $0x10] sm:$0xff] %vm412, %v655
        %660 = vst.msk [vmem:[%s196 + $0x18] sm:$0xff] %vm412, %v656
        %s661 = sand.u32 %s103, 1
        %s662 = scalar_lea.sflag [#allocation3], %s661
        %s663 = sand.u32 %s103, 1
        %s664 = smul.addr %s663, 32
        %s665 = scalar_lea.vmem [#allocation2], %s664
        // Predicated region
        $region33: #{model_forward.3} parent=31 // pred_check
          %p666 = pneg %p113
        $region34: #{model_forward.3} parent=31 // pred_check_branch
          %668 = sbr.rel (%p666) target = $region36
        $region35: #{model_forward.3} parent=31 // pred_region
          %s669 = smul.u32 4, %s17
          %671 = vsyncadd %s662, 0
          %s672 = smul.addr %s669, 8
          %s673 = scalar_lea.hbm %s3, %s672
          %s674 = sshll.u32 %s665, 4
          %s675 = int_to_ptr.vmem [resolvable:$true] %s674
          %s676 = sshll.u32 %s673, 4
          %s677 = int_to_ptr.hbm [resolvable:$true] %s676
          %682 = dma.vmem_to_hbm [thread:$0]  %s675, 512, %s677, %s662, 128, 128, 8
        $region36: #{model_forward.3} parent=31 // pred_fallthru
          _
      $region32: #{model_forward.3} parent=5 // pred_fallthru
        _
      %p683 = scmp.le.s32.totalorder 2, %s12
      // Predicated region
      $region37: #{model_forward.3} parent=5 // pred_check
        %p684 = pneg %p683
      $region38: #{model_forward.3} parent=5 // pred_check_branch
        %686 = sbr.rel (%p684) target = $region40
      $region39: #{model_forward.3} parent=5 // pred_region
        %s687 = ssub.s32 %s12, 2
        // Predicated region
        $region41: #{model_forward.3} parent=39 // pred_check
          %p688 = pneg %p119
        $region42: #{model_forward.3} parent=39 // pred_check_branch
          %690 = sbr.rel (%p688) target = $region44
        $region43: #{model_forward.3} parent=39 // pred_region
          %s691 = sand.u32 %s104, 1
          %s692 = scalar_lea.sflag [#allocation3], %s691
          %s693 = sand.u32 %s104, 1
          %s694 = smul.addr %s693, 32
          %s695 = scalar_lea.vmem [#allocation2], %s694
          %697 = dma.done %s692, 512
        $region44: #{model_forward.3} parent=39 // pred_fallthru
          _
      $region40: #{model_forward.3} parent=5 // pred_fallthru
        _
    $region6: #{model_forward.3} parent=1 // loop_footer
      %s16 = sadd.s32 1, %s12
    $region7: #{model_forward.3} parent=1 // loop_footer_branch
      %11 = sbr.rel target = $region3
    $region8: #{model_forward.3} parent=1 // loop_exit
      _
    %698 = vsyncpa [#allocation3], 1
    %s699 = scalar_lea.sflag [#allocation3], 1
    %700 = vsyncpa %s699, 1

</llo_original>
